<compile_context>
chip_gen: v5e
topology: v5e:2x2
jax: 0.10.0
libtpu: 0.0.40
codegen_flags: <defaults>
</compile_context>

<pallas_src>
import functools

import jax
import jax.numpy as jnp
from jax.experimental import pallas as pl
from jax.experimental.pallas import tpu as pltpu

LANE = 128       # padded feature width (lane multiple)
BIAS_ROWS = 8    # bias slab padded to a sublane multiple (rows 0..2 used)


def _mlp_kernel(x_ref, w_ref, b_ref, o_ref):
    # x_ref: (TB, 128) bf16   w_ref: (3, 128, 128) bf16
    # b_ref: (8, 128)  f32    o_ref: (TB, 128)     f32
    # Padded rows/cols of the weights and biases are zero, so padded lanes stay
    # exactly 0 through every layer (tanh(0) = 0).
    x = x_ref[...]                       # bf16 activations for the MXU
    b = b_ref[...]                       # f32 biases, broadcast in-kernel

    h1 = jnp.tanh(
        jnp.dot(x, w_ref[0], preferred_element_type=jnp.float32) + b[0][None, :]
    )
    h2 = jnp.tanh(
        jnp.dot(h1.astype(jnp.bfloat16), w_ref[1],
                preferred_element_type=jnp.float32) + b[1][None, :]
    )
    h3 = jnp.tanh(
        jnp.dot(h2.astype(jnp.bfloat16), w_ref[2],
                preferred_element_type=jnp.float32) + b[2][None, :]
    )
    o_ref[...] = h3.astype(o_ref.dtype)


def prepare_params(w1, b1, w2, b2, w3, b3):
    """One-time padding/packing of parameters (model init; NOT per call).

    w_i: (in_features, out_features) f32; b_i: (out_features,) f32.
    Returns (w_packed: (3,128,128) bf16, b_packed: (8,128) f32).
    """
    def pad_w(w):
        z = jnp.zeros((LANE, LANE), jnp.float32)
        return z.at[: w.shape[0], : w.shape[1]].set(w)

    def pad_b(b):
        z = jnp.zeros((LANE,), jnp.float32)
        return z.at[: b.shape[0]].set(b)

    w_packed = jnp.stack([pad_w(w1), pad_w(w2), pad_w(w3)]).astype(jnp.bfloat16)
    b_packed = (
        jnp.zeros((BIAS_ROWS, LANE), jnp.float32)
        .at[0].set(pad_b(b1))
        .at[1].set(pad_b(b2))
        .at[2].set(pad_b(b3))
    )
    return w_packed, b_packed


@functools.partial(jax.jit, static_argnames=("out_dim",))
def rep2_forward(x, w_packed, b_packed, *, out_dim=2):
    """x: (B, 100) f32; w_packed/b_packed from prepare_params. Returns (B, out_dim) f32."""
    B, in_dim = x.shape

    # Batch tile: multiple of 16 (bf16 sublane packing), capped at 512 rows
    # (measured ~85% of HBM roofline on v6e; ~1.2 MB total -> trivially fits
    # v7x's halved VMEM as well).
    TB = min(512, ((B + 15) // 16) * 16)
    Bp = ((B + TB - 1) // TB) * TB
    n_tiles = Bp // TB

    # Pad + cast x inside the same jit as the pallas_call (no extra dispatch).
    x_p = jnp.zeros((Bp, LANE), jnp.bfloat16).at[:B, :in_dim].set(
        x.astype(jnp.bfloat16)
    )

    grid_spec = pltpu.PrefetchScalarGridSpec(
        num_scalar_prefetch=0,
        grid=(n_tiles,),
        in_specs=[
            pl.BlockSpec((TB, LANE), lambda i: (i, 0)),            # x tile streams
            pl.BlockSpec((3, LANE, LANE), lambda i: (0, 0, 0)),    # weights resident
            pl.BlockSpec((BIAS_ROWS, LANE), lambda i: (0, 0)),     # biases resident
        ],
        out_specs=pl.BlockSpec((TB, LANE), lambda i: (i, 0)),
    )

    cost = pl.CostEstimate(
        flops=2 * Bp * 3 * LANE * LANE,
        transcendentals=3 * Bp * LANE,
        bytes_accessed=(x_p.size * 2 + w_packed.size * 2
                        + b_packed.size * 4 + Bp * LANE * 4),
    )

    out_p = pl.pallas_call(
        _mlp_kernel,
        out_shape=jax.ShapeDtypeStruct((Bp, LANE), jnp.float32),
        grid_spec=grid_spec,
        compiler_params=pltpu.CompilerParams(
            dimension_semantics=("parallel",)
        ),
        cost_estimate=cost,
    )(x_p, w_packed, b_packed)

    # Lane-dense (Bp,128) output inside the kernel; slice back to (B, out_dim) here
    # (fused into the same jit).
    return out_p[:B, :out_dim]


def init_linear(key, fan_in, fan_out):
    # PyTorch nn.Linear default init: U(-1/sqrt(fan_in), 1/sqrt(fan_in)).
    kw, kb = jax.random.split(key)
    bound = 1.0 / jnp.sqrt(jnp.float32(fan_in))
    w = jax.random.uniform(kw, (fan_in, fan_out), jnp.float32, -bound, bound)
    b = jax.random.uniform(kb, (fan_out,), jnp.float32, -bound, bound)
    return w, b


def reference_forward_bf16(x, w1, b1, w2, b2, w3, b3):
    # Matches the kernel's numerics: bf16 MXU operands, f32 accumulation,
    # f32 bias add + tanh.
    def layer(h, w, b):
        return jnp.tanh(
            jnp.dot(h.astype(jnp.bfloat16), w.astype(jnp.bfloat16),
                    preferred_element_type=jnp.float32) + b
        )
    return layer(layer(layer(x, w1, b1), w2, b2), w3, b3)


def reference_forward_f32(x, w1, b1, w2, b2, w3, b3):
    h1 = jnp.tanh(x @ w1 + b1)
    h2 = jnp.tanh(h1 @ w2 + b2)
    return jnp.tanh(h2 @ w3 + b3)


if __name__ == "__main__":
    key = jax.random.PRNGKey(0)
    k_x, k1, k2, k3 = jax.random.split(key, 4)

    B = 8
    x = jax.random.normal(k_x, (B, 100), jnp.float32)
    w1, b1 = init_linear(k1, 100, 100)
    w2, b2 = init_linear(k2, 100, 100)
    w3, b3 = init_linear(k3, 100, 2)

    # One-time packing (model init) -- not part of the per-call path.
    w_packed, b_packed = prepare_params(w1, b1, w2, b2, w3, b3)
    w_packed, b_packed = jax.block_until_ready((w_packed, b_packed))

    out = rep2_forward(x, w_packed, b_packed, out_dim=2)
    out = jax.block_until_ready(out)

    ref_bf16 = reference_forward_bf16(x, w1, b1, w2, b2, w3, b3)
    ref_f32 = reference_forward_f32(x, w1, b1, w2, b2, w3, b3)

    assert out.shape == (B, 2)
    assert jnp.allclose(out, ref_bf16, atol=1e-4, rtol=1e-4), "mismatch vs bf16-consistent reference"
    assert jnp.allclose(out, ref_f32, atol=5e-2, rtol=5e-2), "drifted too far from f32 reference"

    print("KERNEL_OK")
</pallas_src>

<mosaic_0001>
module attributes {stable_mosaic.version = 11 : i64} {
  func.func @_mlp_kernel(%arg0: i32, %arg1: memref<16x128xbf16, #tpu.memory_space<vmem>>, %arg2: memref<3x128x128xbf16, #tpu.memory_space<vmem>>, %arg3: memref<8x128xf32, #tpu.memory_space<vmem>>, %arg4: memref<16x128xf32, #tpu.memory_space<vmem>>) attributes {dimension_semantics = [#tpu.dimension_semantics<parallel>], iteration_bounds = array<i64: 1>, scalar_prefetch = 0 : i64, scratch_operands = 0 : i64, tpu.core_type = #tpu.core_type<tc>, window_params = [{transform_indices = @transform_0, window_bounds = array<i64: 16, 128>}, {pipeline_mode = #tpu.pipeline_mode<synchronous>, transform_indices = @transform_1, window_bounds = array<i64: 3, 128, 128>}, {pipeline_mode = #tpu.pipeline_mode<synchronous>, transform_indices = @transform_2, window_bounds = array<i64: 8, 128>}, {transform_indices = @transform_3, window_bounds = array<i64: 16, 128>}]} {
    %c0 = arith.constant 0 : index
    %c0_0 = arith.constant 0 : index
    %0 = vector.load %arg1[%c0, %c0_0] : memref<16x128xbf16, #tpu.memory_space<vmem>>, vector<16x128xbf16>
    %c0_1 = arith.constant 0 : index
    %c0_2 = arith.constant 0 : index
    %1 = vector.load %arg3[%c0_1, %c0_2] : memref<8x128xf32, #tpu.memory_space<vmem>>, vector<8x128xf32>
    %c0_3 = arith.constant 0 : index
    %c0_4 = arith.constant 0 : index
    %c0_5 = arith.constant 0 : index
    %2 = vector.load %arg2[%c0_3, %c0_4, %c0_5] : memref<3x128x128xbf16, #tpu.memory_space<vmem>>, vector<1x128x128xbf16>
    %3 = vector.shape_cast %2 : vector<1x128x128xbf16> to vector<128x128xbf16>
    %cst = arith.constant dense<0.000000e+00> : vector<16x128xf32>
    %4 = tpu.matmul %0, %3, %cst {dimension_numbers = #tpu.dot_dimension_numbers<[1], [0], [0], [1], [0, 0, 1, 1], [], []>} : vector<16x128xbf16>, vector<128x128xbf16>, vector<16x128xf32> -> vector<16x128xf32>
    %5 = vector.extract_strided_slice %1 {offsets = [0, 0], sizes = [1, 128], strides = [1, 1]} : vector<8x128xf32> to vector<1x128xf32>
    %6 = vector.shape_cast %5 : vector<1x128xf32> to vector<128xf32>
    %7 = vector.shape_cast %6 : vector<128xf32> to vector<1x128xf32>
    %8 = vector.broadcast %7 : vector<1x128xf32> to vector<16x128xf32>
    %9 = arith.addf %4, %8 : vector<16x128xf32>
    %10 = math.tanh %9 : vector<16x128xf32>
    %11 = arith.truncf %10 : vector<16x128xf32> to vector<16x128xbf16>
    %c1 = arith.constant 1 : index
    %c0_6 = arith.constant 0 : index
    %c0_7 = arith.constant 0 : index
    %12 = vector.load %arg2[%c1, %c0_6, %c0_7] : memref<3x128x128xbf16, #tpu.memory_space<vmem>>, vector<1x128x128xbf16>
    %13 = vector.shape_cast %12 : vector<1x128x128xbf16> to vector<128x128xbf16>
    %cst_8 = arith.constant dense<0.000000e+00> : vector<16x128xf32>
    %14 = tpu.matmul %11, %13, %cst_8 {dimension_numbers = #tpu.dot_dimension_numbers<[1], [0], [0], [1], [0, 0, 1, 1], [], []>} : vector<16x128xbf16>, vector<128x128xbf16>, vector<16x128xf32> -> vector<16x128xf32>
    %15 = vector.extract_strided_slice %1 {offsets = [1, 0], sizes = [1, 128], strides = [1, 1]} : vector<8x128xf32> to vector<1x128xf32>
    %16 = vector.shape_cast %15 : vector<1x128xf32> to vector<128xf32>
    %17 = vector.shape_cast %16 : vector<128xf32> to vector<1x128xf32>
    %18 = vector.broadcast %17 : vector<1x128xf32> to vector<16x128xf32>
    %19 = arith.addf %14, %18 : vector<16x128xf32>
    %20 = math.tanh %19 : vector<16x128xf32>
    %21 = arith.truncf %20 : vector<16x128xf32> to vector<16x128xbf16>
    %c2 = arith.constant 2 : index
    %c0_9 = arith.constant 0 : index
    %c0_10 = arith.constant 0 : index
    %22 = vector.load %arg2[%c2, %c0_9, %c0_10] : memref<3x128x128xbf16, #tpu.memory_space<vmem>>, vector<1x128x128xbf16>
    %23 = vector.shape_cast %22 : vector<1x128x128xbf16> to vector<128x128xbf16>
    %cst_11 = arith.constant dense<0.000000e+00> : vector<16x128xf32>
    %24 = tpu.matmul %21, %23, %cst_11 {dimension_numbers = #tpu.dot_dimension_numbers<[1], [0], [0], [1], [0, 0, 1, 1], [], []>} : vector<16x128xbf16>, vector<128x128xbf16>, vector<16x128xf32> -> vector<16x128xf32>
    %25 = vector.extract_strided_slice %1 {offsets = [2, 0], sizes = [1, 128], strides = [1, 1]} : vector<8x128xf32> to vector<1x128xf32>
    %26 = vector.shape_cast %25 : vector<1x128xf32> to vector<128xf32>
    %27 = vector.shape_cast %26 : vector<128xf32> to vector<1x128xf32>
    %28 = vector.broadcast %27 : vector<1x128xf32> to vector<16x128xf32>
    %29 = arith.addf %24, %28 : vector<16x128xf32>
    %30 = math.tanh %29 : vector<16x128xf32>
    %c0_12 = arith.constant 0 : index
    %c0_13 = arith.constant 0 : index
    %31 = vector.load %arg4[%c0_12, %c0_13] : memref<16x128xf32, #tpu.memory_space<vmem>>, vector<16x128xf32>
    tpu.vector_store %arg4[%c0_12, %c0_13], %30 {strides = array<i32>} : memref<16x128xf32, #tpu.memory_space<vmem>>, vector<16x128xf32>,
    return
  }
  func.func @transform_0(%arg0: i32) -> (i32, i32) {
    %c0_i32 = arith.constant 0 : i32
    %c0_i32_0 = arith.constant 0 : i32
    return %arg0, %c0_i32 : i32, i32
  }
  func.func @transform_1(%arg0: i32) -> (i32, i32, i32) {
    %c0_i32 = arith.constant 0 : i32
    %c0_i32_0 = arith.constant 0 : i32
    %c0_i32_1 = arith.constant 0 : i32
    %c0_i32_2 = arith.constant 0 : i32
    return %c0_i32, %c0_i32_0, %c0_i32_1 : i32, i32, i32
  }
  func.func @transform_2(%arg0: i32) -> (i32, i32) {
    %c0_i32 = arith.constant 0 : i32
    %c0_i32_0 = arith.constant 0 : i32
    %c0_i32_1 = arith.constant 0 : i32
    return %c0_i32, %c0_i32_0 : i32, i32
  }
  func.func @transform_3(%arg0: i32) -> (i32, i32) {
    %c0_i32 = arith.constant 0 : i32
    %c0_i32_0 = arith.constant 0 : i32
    return %arg0, %c0_i32 : i32, i32
  }
}

</mosaic_0001>

<llo_original>
// kernel: rep2_forward.1
$region0: #{rep2_forward.1}
  #allocation0 [shape = 'u32[]', space=smem, size = 0x4, offset = 0x4, fixed_abs, tag = 'smem constant byte address 0x4 - core index']
  #allocation1 [shape = 'u32[72,128]{1,0:T(1,128)}', space=vmem, size = 0x9000, scoped, tag = 'internal scratch']
  %s0 = inlined_call_operand.vmem [shape: bf16[16,128], index: 0, kind: input, shape index: {}]
  %s1 = inlined_call_operand.hbm [shape: bf16[3,128,128], index: 1, kind: input, shape index: {}]
  %s2 = inlined_call_operand.vmem [shape: f32[8,128], index: 2, kind: input, shape index: {}]
  %s3 = inlined_call_operand.vmem [shape: f32[16,128], index: 3, kind: output, shape index: {}]
  %s4 = sld [smem:[#allocation0]]
  $region26: #{rep2_forward.1} parent=0
    _
  %s6 = ssub.s32 1, %s4
  %s7 = scalar_select 0, %s6, %s4
  $region1: #{rep2_forward.1} parent=0
    #allocation2 [shape = 'u8[98304]{0}', space=vmem, size = 0x18000, scoped, tag = 'input window, operand 1, single buffered']
    #allocation3 [shape = 's32[1]{0}', space=sflag, size = 0x4, scoped, tag = 'scoped memory for rep2_forward.1']
    %8 = vsyncpa [#allocation3], 0
    // Predicated region
    $region2: #{rep2_forward.1} parent=1 // pred_check
      _
    $region3: #{rep2_forward.1} parent=1 // pred_check_branch
      %10 = sbr.rel (0) target = $region5
    $region4: #{rep2_forward.1} parent=1 // pred_region
      _
    $region5: #{rep2_forward.1} parent=1 // pred_fallthru
      _
    // Predicated region
    $region6: #{rep2_forward.1} parent=1 // pred_check
      _
    $region7: #{rep2_forward.1} parent=1 // pred_check_branch
      %12 = sbr.rel (0) target = $region9
    $region8: #{rep2_forward.1} parent=1 // pred_region
      %14 = vsyncadd [#allocation3], 0
      %s15 = sshll.u32 %s1, 4
      %s16 = int_to_ptr.hbm [resolvable:$true] %s15
      %s17 = sshll.u32 [#allocation2], 4
      %s18 = int_to_ptr.vmem [resolvable:$true] %s17
      %23 = dma.hbm_to_vmem [thread:$0]  %s16, 3072, %s18, [#allocation3], 64, 64, 4
    $region9: #{rep2_forward.1} parent=1 // pred_fallthru
      _
    // Predicated region
    $region10: #{rep2_forward.1} parent=1 // pred_check
      _
    $region11: #{rep2_forward.1} parent=1 // pred_check_branch
      %25 = sbr.rel (0) target = $region13
    $region12: #{rep2_forward.1} parent=1 // pred_region
      _
    $region13: #{rep2_forward.1} parent=1 // pred_fallthru
      _
    // Predicated region
    $region14: #{rep2_forward.1} parent=1 // pred_check
      _
    $region15: #{rep2_forward.1} parent=1 // pred_check_branch
      %27 = sbr.rel (0) target = $region17
    $region16: #{rep2_forward.1} parent=1 // pred_region
      %29 = dma.done [#allocation3], 3072
    $region17: #{rep2_forward.1} parent=1 // pred_fallthru
      _
    %v30 = vld [vmem:[%s0] sm:$0xf]
    %v31 = vld [vmem:[%s0 + $0x4] sm:$0xf]
    %v32 = vld [vmem:[%s2] sm:$0xff]
    %v33 = vld [vmem:[#allocation2] sm:$0xf]
    %v34 = vld [vmem:[#allocation2 + $0x4] sm:$0xf]
    %v35 = vld [vmem:[#allocation2 + $0x8] sm:$0xf]
    %v36 = vld [vmem:[#allocation2 + $0xc] sm:$0xf]
    %v37 = vld [vmem:[#allocation2 + $0x10] sm:$0xf]
    %v38 = vld [vmem:[#allocation2 + $0x14] sm:$0xf]
    %v39 = vld [vmem:[#allocation2 + $0x18] sm:$0xf]
    %v40 = vld [vmem:[#allocation2 + $0x1c] sm:$0xf]
    %v41 = vld [vmem:[#allocation2 + $0x20] sm:$0xf]
    %v42 = vld [vmem:[#allocation2 + $0x24] sm:$0xf]
    %v43 = vld [vmem:[#allocation2 + $0x28] sm:$0xf]
    %v44 = vld [vmem:[#allocation2 + $0x2c] sm:$0xf]
    %v45 = vld [vmem:[#allocation2 + $0x30] sm:$0xf]
    %v46 = vld [vmem:[#allocation2 + $0x34] sm:$0xf]
    %v47 = vld [vmem:[#allocation2 + $0x38] sm:$0xf]
    %v48 = vld [vmem:[#allocation2 + $0x3c] sm:$0xf]
    %v49 = vperm.slane %v32, 0
    %v52 = vunpack.c.l.b16 %v30
    %v53 = vunpack.c.l.b16 %v31
    %v54 = vpack.c.b16 %v53, %v52
    %v72 = vunpack.c.l.b16 %v33
    %v73 = vunpack.c.l.b16 %v34
    %v74 = vunpack.c.l.b16 %v35
    %v75 = vunpack.c.l.b16 %v36
    %v76 = vunpack.c.l.b16 %v37
    %v77 = vunpack.c.l.b16 %v38
    %v78 = vunpack.c.l.b16 %v39
    %v79 = vunpack.c.l.b16 %v40
    %v80 = vunpack.c.l.b16 %v41
    %v81 = vunpack.c.l.b16 %v42
    %v82 = vunpack.c.l.b16 %v43
    %v83 = vunpack.c.l.b16 %v44
    %v84 = vunpack.c.l.b16 %v45
    %v85 = vunpack.c.l.b16 %v46
    %v86 = vunpack.c.l.b16 %v47
    %v87 = vunpack.c.l.b16 %v48
    %v88 = vpack.c.b16 %v73, %v72
    %v89 = vpack.c.b16 %v75, %v74
    %v90 = vpack.c.b16 %v77, %v76
    %v91 = vpack.c.b16 %v79, %v78
    %v92 = vpack.c.b16 %v81, %v80
    %v93 = vpack.c.b16 %v83, %v82
    %v94 = vpack.c.b16 %v85, %v84
    %v95 = vpack.c.b16 %v87, %v86
    %104 = vmatpush.bf16.msra.mxu0 %v95
    %105 = vmatpush.bf16.msra.mxu0 %v94
    %106 = vmatpush.bf16.msra.mxu0 %v93
    %107 = vmatpush.bf16.msra.mxu0 %v92
    %108 = vmatpush.bf16.msra.mxu0 %v91
    %109 = vmatpush.bf16.msra.mxu0 %v90
    %110 = vmatpush.bf16.msra.mxu0 %v89
    %111 = vmatpush.bf16.msra.mxu0 %v88
    %112 = vmatmul.bf16.gmra.mxu0 %v54
    %v113 = vpop.f32.mrf.mxu0
    %v114 = vadd.f32 %v49, %v113
    %v115 = vpop.f32.mrf.mxu0
    %v116 = vadd.f32 %v49, %v115
    %117 = vdwg.mxu0
    %v118 = vtanh.pop %v114
    %v119 = vtanh.pop %v116
    %v120 = vpack.c.bf16 %v119, %v118
    %s121 = scalar_lea.vmem [#allocation2], 64
    %v122 = vld [vmem:[%s121] sm:$0xf]
    %v123 = vld [vmem:[%s121 + $0x4] sm:$0xf]
    %v124 = vld [vmem:[%s121 + $0x8] sm:$0xf]
    %v125 = vld [vmem:[%s121 + $0xc] sm:$0xf]
    %v126 = vld [vmem:[%s121 + $0x10] sm:$0xf]
    %v127 = vld [vmem:[%s121 + $0x14] sm:$0xf]
    %v128 = vld [vmem:[%s121 + $0x18] sm:$0xf]
    %v129 = vld [vmem:[%s121 + $0x1c] sm:$0xf]
    %v130 = vld [vmem:[%s121 + $0x20] sm:$0xf]
    %v131 = vld [vmem:[%s121 + $0x24] sm:$0xf]
    %v132 = vld [vmem:[%s121 + $0x28] sm:$0xf]
    %v133 = vld [vmem:[%s121 + $0x2c] sm:$0xf]
    %v134 = vld [vmem:[%s121 + $0x30] sm:$0xf]
    %v135 = vld [vmem:[%s121 + $0x34] sm:$0xf]
    %v136 = vld [vmem:[%s121 + $0x38] sm:$0xf]
    %v137 = vld [vmem:[%s121 + $0x3c] sm:$0xf]
    %v138 = vperm.slane %v32, 1
    %v155 = vunpack.c.l.b16 %v122
    %v156 = vunpack.c.l.b16 %v123
    %v157 = vunpack.c.l.b16 %v124
    %v158 = vunpack.c.l.b16 %v125
    %v159 = vunpack.c.l.b16 %v126
    %v160 = vunpack.c.l.b16 %v127
    %v161 = vunpack.c.l.b16 %v128
    %v162 = vunpack.c.l.b16 %v129
    %v163 = vunpack.c.l.b16 %v130
    %v164 = vunpack.c.l.b16 %v131
    %v165 = vunpack.c.l.b16 %v132
    %v166 = vunpack.c.l.b16 %v133
    %v167 = vunpack.c.l.b16 %v134
    %v168 = vunpack.c.l.b16 %v135
    %v169 = vunpack.c.l.b16 %v136
    %v170 = vunpack.c.l.b16 %v137
    %v171 = vpack.c.b16 %v156, %v155
    %v172 = vpack.c.b16 %v158, %v157
    %v173 = vpack.c.b16 %v160, %v159
    %v174 = vpack.c.b16 %v162, %v161
    %v175 = vpack.c.b16 %v164, %v163
    %v176 = vpack.c.b16 %v166, %v165
    %v177 = vpack.c.b16 %v168, %v167
    %v178 = vpack.c.b16 %v170, %v169
    %187 = vmatpush.bf16.msra.mxu0 %v178
    %188 = vmatpush.bf16.msra.mxu0 %v177
    %189 = vmatpush.bf16.msra.mxu0 %v176
    %190 = vmatpush.bf16.msra.mxu0 %v175
    %191 = vmatpush.bf16.msra.mxu0 %v174
    %192 = vmatpush.bf16.msra.mxu0 %v173
    %193 = vmatpush.bf16.msra.mxu0 %v172
    %194 = vmatpush.bf16.msra.mxu0 %v171
    %195 = vmatmul.bf16.gmra.mxu0 %v120
    %v196 = vpop.f32.mrf.mxu0
    %v197 = vadd.f32 %v138, %v196
    %v198 = vpop.f32.mrf.mxu0
    %v199 = vadd.f32 %v138, %v198
    %200 = vdwg.mxu0
    %v201 = vtanh.pop %v197
    %v202 = vtanh.pop %v199
    %v203 = vpack.c.bf16 %v202, %v201
    %s204 = scalar_lea.vmem [#allocation2], 128
    %v205 = vld [vmem:[%s204] sm:$0xf]
    %v206 = vld [vmem:[%s204 + $0x4] sm:$0xf]
    %v207 = vld [vmem:[%s204 + $0x8] sm:$0xf]
    %v208 = vld [vmem:[%s204 + $0xc] sm:$0xf]
    %v209 = vld [vmem:[%s204 + $0x10] sm:$0xf]
    %v210 = vld [vmem:[%s204 + $0x14] sm:$0xf]
    %v211 = vld [vmem:[%s204 + $0x18] sm:$0xf]
    %v212 = vld [vmem:[%s204 + $0x1c] sm:$0xf]
    %v213 = vld [vmem:[%s204 + $0x20] sm:$0xf]
    %v214 = vld [vmem:[%s204 + $0x24] sm:$0xf]
    %v215 = vld [vmem:[%s204 + $0x28] sm:$0xf]
    %v216 = vld [vmem:[%s204 + $0x2c] sm:$0xf]
    %v217 = vld [vmem:[%s204 + $0x30] sm:$0xf]
    %v218 = vld [vmem:[%s204 + $0x34] sm:$0xf]
    %v219 = vld [vmem:[%s204 + $0x38] sm:$0xf]
    %v220 = vld [vmem:[%s204 + $0x3c] sm:$0xf]
    %v221 = vperm.slane %v32, 2
    %v238 = vunpack.c.l.b16 %v205
    %v239 = vunpack.c.l.b16 %v206
    %v240 = vunpack.c.l.b16 %v207
    %v241 = vunpack.c.l.b16 %v208
    %v242 = vunpack.c.l.b16 %v209
    %v243 = vunpack.c.l.b16 %v210
    %v244 = vunpack.c.l.b16 %v211
    %v245 = vunpack.c.l.b16 %v212
    %v246 = vunpack.c.l.b16 %v213
    %v247 = vunpack.c.l.b16 %v214
    %v248 = vunpack.c.l.b16 %v215
    %v249 = vunpack.c.l.b16 %v216
    %v250 = vunpack.c.l.b16 %v217
    %v251 = vunpack.c.l.b16 %v218
    %v252 = vunpack.c.l.b16 %v219
    %v253 = vunpack.c.l.b16 %v220
    %v254 = vpack.c.b16 %v239, %v238
    %v255 = vpack.c.b16 %v241, %v240
    %v256 = vpack.c.b16 %v243, %v242
    %v257 = vpack.c.b16 %v245, %v244
    %v258 = vpack.c.b16 %v247, %v246
    %v259 = vpack.c.b16 %v249, %v248
    %v260 = vpack.c.b16 %v251, %v250
    %v261 = vpack.c.b16 %v253, %v252
    %270 = vmatpush.bf16.msra.mxu0 %v261
    %271 = vmatpush.bf16.msra.mxu0 %v260
    %272 = vmatpush.bf16.msra.mxu0 %v259
    %273 = vmatpush.bf16.msra.mxu0 %v258
    %274 = vmatpush.bf16.msra.mxu0 %v257
    %275 = vmatpush.bf16.msra.mxu0 %v256
    %276 = vmatpush.bf16.msra.mxu0 %v255
    %277 = vmatpush.bf16.msra.mxu0 %v254
    %278 = vmatmul.bf16.gmra.mxu0 %v203
    %v279 = vpop.f32.mrf.mxu0
    %v280 = vadd.f32 %v221, %v279
    %v281 = vpop.f32.mrf.mxu0
    %v282 = vadd.f32 %v221, %v281
    %283 = vdwg.mxu0
    %v284 = vtanh.pop %v280
    %v285 = vtanh.pop %v282
    %286 = vst [vmem:[%s3] sm:$0xff] %v284
    %287 = vst [vmem:[%s3 + $0x8] sm:$0xff] %v285
    // Predicated region
    $region18: #{rep2_forward.1} parent=1 // pred_check
      _
    $region19: #{rep2_forward.1} parent=1 // pred_check_branch
      %289 = sbr.rel (0) target = $region21
    $region20: #{rep2_forward.1} parent=1 // pred_region
      _
    $region21: #{rep2_forward.1} parent=1 // pred_fallthru
      _
    // Predicated region
    $region22: #{rep2_forward.1} parent=1 // pred_check
      _
    $region23: #{rep2_forward.1} parent=1 // pred_check_branch
      %291 = sbr.rel (0) target = $region25
    $region24: #{rep2_forward.1} parent=1 // pred_region
      _
    $region25: #{rep2_forward.1} parent=1 // pred_fallthru
      _
    %292 = vsyncpa [#allocation3], 1

</llo_original>
